<compile_context>
chip_gen: v7x
topology: tpu7x:2x2x1
jax: 0.10.0
libtpu: 0.0.40
codegen_flags: <defaults>
</compile_context>

<pallas_src>
import jax
import jax.numpy as jnp
from jax.experimental import pallas as pl
from jax.experimental.pallas import tpu as pltpu


def _round_up(x, m):
    return ((x + m - 1) // m) * m


def _leaky_relu(x, slope=0.2):
    return jnp.where(x > 0, x, slope * x)


def _discriminator_kernel(x_ref,
                          w1_ref, b1_ref,
                          w2_ref, b2_ref,
                          w3_ref, b3_ref,
                          w4_ref, b4_ref,
                          o_ref):
    # Layer 1: bf16 (block_b, 896) @ (896, 128) -> f32; bias + leaky_relu in f32.
    h = jnp.dot(x_ref[...], w1_ref[...], preferred_element_type=jnp.float32)
    h = _leaky_relu(h + b1_ref[...])
    # dropout p=0.3: identity in eval mode

    # Layer 2: (block_b, 128) @ (128, 64)
    h = jnp.dot(h.astype(jnp.bfloat16), w2_ref[...],
                preferred_element_type=jnp.float32)
    h = _leaky_relu(h + b2_ref[...])
    # dropout p=0.3: identity in eval mode

    # Layer 3: (block_b, 64) @ (64, 32)
    h = jnp.dot(h.astype(jnp.bfloat16), w3_ref[...],
                preferred_element_type=jnp.float32)
    h = _leaky_relu(h + b3_ref[...])
    # dropout p=0.3: identity in eval mode

    # Layer 4 into a lane-dense 128-wide padded slab (real logits in col 0..out_size-1).
    out = jnp.dot(h.astype(jnp.bfloat16), w4_ref[...],
                  preferred_element_type=jnp.float32)
    o_ref[...] = (out + b4_ref[...]).astype(o_ref.dtype)


def discriminator_forward(x, params, *, block_b=512):
    """x: any shape that reshapes to (-1, 784) (NCHW MNIST images ok)."""
    input_size = 784
    x2d = x.reshape(-1, input_size).astype(jnp.float32)
    B = x2d.shape[0]

    (w1, b1), (w2, b2), (w3, b3), (w4, b4) = params
    out_size = w4.shape[1]

    # --- TPU-friendly padded shapes ---
    k_pad = _round_up(input_size, 128)     # 784 -> 896 (full-width K tiles)
    out_pad = _round_up(out_size, 128)     # 1   -> 128 (lane-dense output store)

    # Batch tile: multiple of 8, capped at 1024 (v5e scoped-VMEM friendly),
    # shrunk for tiny batches so we don't over-pad.
    block_b = max(8, min(block_b, 1024, _round_up(B, 8)))
    b_pad = _round_up(B, block_b)

    # bf16 inputs/weights (halve HBM traffic); biases stay f32 for the VPU epilogue.
    x_p = jnp.pad(x2d.astype(jnp.bfloat16),
                  ((0, b_pad - B), (0, k_pad - input_size)))
    w1_p = jnp.pad(w1.astype(jnp.bfloat16), ((0, k_pad - input_size), (0, 0)))
    w2_p = w2.astype(jnp.bfloat16)
    w3_p = w3.astype(jnp.bfloat16)
    w4_p = jnp.pad(w4.astype(jnp.bfloat16), ((0, 0), (0, out_pad - out_size)))
    b4_p = jnp.pad(b4.astype(jnp.float32), ((0, 0), (0, out_pad - out_size)))

    full = lambda arr: pl.BlockSpec(arr.shape, lambda i: (0, 0))

    out_padded = pl.pallas_call(
        _discriminator_kernel,
        out_shape=jax.ShapeDtypeStruct((b_pad, out_pad), jnp.float32),
        grid_spec=pltpu.PrefetchScalarGridSpec(
            num_scalar_prefetch=0,
            grid=(b_pad // block_b,),
            in_specs=[
                pl.BlockSpec((block_b, k_pad), lambda i: (i, 0)),
                full(w1_p), full(b1),
                full(w2_p), full(b2),
                full(w3_p), full(b3),
                full(w4_p), full(b4_p),
            ],
            out_specs=pl.BlockSpec((block_b, out_pad), lambda i: (i, 0)),
        ),
        compiler_params=pltpu.CompilerParams(
            dimension_semantics=("parallel",)),
    )(x_p, w1_p, b1, w2_p, b2, w3_p, b3, w4_p, b4_p)

    return out_padded[:B, :out_size]


def init_discriminator_params(key, input_size=784, hidden_dim=32, output_size=1):
    """Init matching nn.Linear's U(-1/sqrt(fan_in), 1/sqrt(fan_in)).
    Weights stored as (in_features, out_features) — i.e. torch weight transposed."""
    dims = [input_size, hidden_dim * 4, hidden_dim * 2, hidden_dim, output_size]
    params = []
    for fan_in, fan_out in zip(dims[:-1], dims[1:]):
        key, kw, kb = jax.random.split(key, 3)
        bound = 1.0 / (fan_in ** 0.5)
        w = jax.random.uniform(kw, (fan_in, fan_out), jnp.float32, -bound, bound)
        b = jax.random.uniform(kb, (1, fan_out), jnp.float32, -bound, bound)
        params.append((w, b))
    return params


def discriminator_reference(x, params):
    """Pure-JAX f32 reference for validation (dropout = identity, eval mode)."""
    h = x.reshape(-1, 784).astype(jnp.float32)
    (w1, b1), (w2, b2), (w3, b3), (w4, b4) = params
    h = _leaky_relu(h @ w1 + b1)
    h = _leaky_relu(h @ w2 + b2)
    h = _leaky_relu(h @ w3 + b3)
    return h @ w4 + b4


if __name__ == "__main__":
    key = jax.random.PRNGKey(0)
    k_x, k_p = jax.random.split(key)

    batch, hidden_dim, output_size = 8, 32, 1
    # MNIST-style NCHW input; forward flattens to (-1, 784).
    x = jax.random.normal(k_x, (batch, 1, 28, 28), jnp.float32)

    params = init_discriminator_params(k_p, input_size=784,
                                       hidden_dim=hidden_dim,
                                       output_size=output_size)

    out = discriminator_forward(x, params)
    out = jax.block_until_ready(out)

    ref = discriminator_reference(x, params)
    assert out.shape == (batch, output_size), out.shape
    # bf16 matmul inputs (f32 accumulation) vs f32 reference -> loose tolerance.
    assert jnp.allclose(out, ref, atol=2e-2, rtol=2e-2), (
        "mismatch vs JAX reference: max abs diff = "
        f"{float(jnp.max(jnp.abs(out - ref)))}")

    print("KERNEL_OK")
</pallas_src>

<mosaic_0001>
module attributes {stable_mosaic.version = 11 : i64} {
  func.func @_discriminator_kernel(%arg0: i32, %arg1: memref<8x896xbf16, #tpu.memory_space<vmem>>, %arg2: memref<896x128xbf16, #tpu.memory_space<vmem>>, %arg3: memref<1x128xf32, #tpu.memory_space<vmem>>, %arg4: memref<128x64xbf16, #tpu.memory_space<vmem>>, %arg5: memref<1x64xf32, #tpu.memory_space<vmem>>, %arg6: memref<64x32xbf16, #tpu.memory_space<vmem>>, %arg7: memref<1x32xf32, #tpu.memory_space<vmem>>, %arg8: memref<32x128xbf16, #tpu.memory_space<vmem>>, %arg9: memref<1x128xf32, #tpu.memory_space<vmem>>, %arg10: memref<8x128xf32, #tpu.memory_space<vmem>>) attributes {dimension_semantics = [#tpu.dimension_semantics<parallel>], iteration_bounds = array<i64: 1>, scalar_prefetch = 0 : i64, scratch_operands = 0 : i64, tpu.core_type = #tpu.core_type<tc>, window_params = [{transform_indices = @transform_0, window_bounds = array<i64: 8, 896>}, {pipeline_mode = #tpu.pipeline_mode<synchronous>, transform_indices = @transform_1, window_bounds = array<i64: 896, 128>}, {pipeline_mode = #tpu.pipeline_mode<synchronous>, transform_indices = @transform_2, window_bounds = array<i64: 1, 128>}, {pipeline_mode = #tpu.pipeline_mode<synchronous>, transform_indices = @transform_3, window_bounds = array<i64: 128, 64>}, {pipeline_mode = #tpu.pipeline_mode<synchronous>, transform_indices = @transform_4, window_bounds = array<i64: 1, 64>}, {pipeline_mode = #tpu.pipeline_mode<synchronous>, transform_indices = @transform_5, window_bounds = array<i64: 64, 32>}, {pipeline_mode = #tpu.pipeline_mode<synchronous>, transform_indices = @transform_6, window_bounds = array<i64: 1, 32>}, {pipeline_mode = #tpu.pipeline_mode<synchronous>, transform_indices = @transform_7, window_bounds = array<i64: 32, 128>}, {pipeline_mode = #tpu.pipeline_mode<synchronous>, transform_indices = @transform_8, window_bounds = array<i64: 1, 128>}, {transform_indices = @transform_9, window_bounds = array<i64: 8, 128>}]} {
    %c0 = arith.constant 0 : index
    %c0_0 = arith.constant 0 : index
    %0 = vector.load %arg1[%c0, %c0_0] : memref<8x896xbf16, #tpu.memory_space<vmem>>, vector<8x896xbf16>
    %c0_1 = arith.constant 0 : index
    %c0_2 = arith.constant 0 : index
    %1 = vector.load %arg2[%c0_1, %c0_2] : memref<896x128xbf16, #tpu.memory_space<vmem>>, vector<896x128xbf16>
    %cst = arith.constant dense<0.000000e+00> : vector<8x128xf32>
    %2 = tpu.matmul %0, %1, %cst {dimension_numbers = #tpu.dot_dimension_numbers<[1], [0], [0], [1], [0, 0, 1, 1], [], []>} : vector<8x896xbf16>, vector<896x128xbf16>, vector<8x128xf32> -> vector<8x128xf32>
    %c0_3 = arith.constant 0 : index
    %c0_4 = arith.constant 0 : index
    %3 = vector.load %arg3[%c0_3, %c0_4] : memref<1x128xf32, #tpu.memory_space<vmem>>, vector<1x128xf32>
    %4 = vector.broadcast %3 : vector<1x128xf32> to vector<8x128xf32>
    %5 = arith.addf %2, %4 : vector<8x128xf32>
    %cst_5 = arith.constant 0.000000e+00 : f32
    %6 = vector.broadcast %cst_5 : f32 to vector<8x128xf32>
    %7 = arith.cmpf ogt, %5, %6 : vector<8x128xf32>
    %cst_6 = arith.constant 2.000000e-01 : f32
    %8 = vector.broadcast %cst_6 : f32 to vector<8x128xf32>
    %9 = arith.mulf %8, %5 : vector<8x128xf32>
    %10 = arith.select %7, %5, %9 : vector<8x128xi1>, vector<8x128xf32>
    %11 = arith.truncf %10 : vector<8x128xf32> to vector<8x128xbf16>
    %c0_7 = arith.constant 0 : index
    %c0_8 = arith.constant 0 : index
    %12 = vector.load %arg4[%c0_7, %c0_8] : memref<128x64xbf16, #tpu.memory_space<vmem>>, vector<128x64xbf16>
    %cst_9 = arith.constant dense<0.000000e+00> : vector<8x64xf32>
    %13 = tpu.matmul %11, %12, %cst_9 {dimension_numbers = #tpu.dot_dimension_numbers<[1], [0], [0], [1], [0, 0, 1, 1], [], []>} : vector<8x128xbf16>, vector<128x64xbf16>, vector<8x64xf32> -> vector<8x64xf32>
    %c0_10 = arith.constant 0 : index
    %c0_11 = arith.constant 0 : index
    %14 = vector.load %arg5[%c0_10, %c0_11] : memref<1x64xf32, #tpu.memory_space<vmem>>, vector<1x64xf32>
    %15 = vector.broadcast %14 : vector<1x64xf32> to vector<8x64xf32>
    %16 = arith.addf %13, %15 : vector<8x64xf32>
    %cst_12 = arith.constant 0.000000e+00 : f32
    %17 = vector.broadcast %cst_12 : f32 to vector<8x64xf32>
    %18 = arith.cmpf ogt, %16, %17 : vector<8x64xf32>
    %cst_13 = arith.constant 2.000000e-01 : f32
    %19 = vector.broadcast %cst_13 : f32 to vector<8x64xf32>
    %20 = arith.mulf %19, %16 : vector<8x64xf32>
    %21 = arith.select %18, %16, %20 : vector<8x64xi1>, vector<8x64xf32>
    %22 = arith.truncf %21 : vector<8x64xf32> to vector<8x64xbf16>
    %c0_14 = arith.constant 0 : index
    %c0_15 = arith.constant 0 : index
    %23 = vector.load %arg6[%c0_14, %c0_15] : memref<64x32xbf16, #tpu.memory_space<vmem>>, vector<64x32xbf16>
    %cst_16 = arith.constant dense<0.000000e+00> : vector<8x32xf32>
    %24 = tpu.matmul %22, %23, %cst_16 {dimension_numbers = #tpu.dot_dimension_numbers<[1], [0], [0], [1], [0, 0, 1, 1], [], []>} : vector<8x64xbf16>, vector<64x32xbf16>, vector<8x32xf32> -> vector<8x32xf32>
    %c0_17 = arith.constant 0 : index
    %c0_18 = arith.constant 0 : index
    %25 = vector.load %arg7[%c0_17, %c0_18] : memref<1x32xf32, #tpu.memory_space<vmem>>, vector<1x32xf32>
    %26 = vector.broadcast %25 : vector<1x32xf32> to vector<8x32xf32>
    %27 = arith.addf %24, %26 : vector<8x32xf32>
    %cst_19 = arith.constant 0.000000e+00 : f32
    %28 = vector.broadcast %cst_19 : f32 to vector<8x32xf32>
    %29 = arith.cmpf ogt, %27, %28 : vector<8x32xf32>
    %cst_20 = arith.constant 2.000000e-01 : f32
    %30 = vector.broadcast %cst_20 : f32 to vector<8x32xf32>
    %31 = arith.mulf %30, %27 : vector<8x32xf32>
    %32 = arith.select %29, %27, %31 : vector<8x32xi1>, vector<8x32xf32>
    %33 = arith.truncf %32 : vector<8x32xf32> to vector<8x32xbf16>
    %c0_21 = arith.constant 0 : index
    %c0_22 = arith.constant 0 : index
    %34 = vector.load %arg8[%c0_21, %c0_22] : memref<32x128xbf16, #tpu.memory_space<vmem>>, vector<32x128xbf16>
    %cst_23 = arith.constant dense<0.000000e+00> : vector<8x128xf32>
    %35 = tpu.matmul %33, %34, %cst_23 {dimension_numbers = #tpu.dot_dimension_numbers<[1], [0], [0], [1], [0, 0, 1, 1], [], []>} : vector<8x32xbf16>, vector<32x128xbf16>, vector<8x128xf32> -> vector<8x128xf32>
    %c0_24 = arith.constant 0 : index
    %c0_25 = arith.constant 0 : index
    %36 = vector.load %arg9[%c0_24, %c0_25] : memref<1x128xf32, #tpu.memory_space<vmem>>, vector<1x128xf32>
    %37 = vector.broadcast %36 : vector<1x128xf32> to vector<8x128xf32>
    %38 = arith.addf %35, %37 : vector<8x128xf32>
    %c0_26 = arith.constant 0 : index
    %c0_27 = arith.constant 0 : index
    %39 = vector.load %arg10[%c0_26, %c0_27] : memref<8x128xf32, #tpu.memory_space<vmem>>, vector<8x128xf32>
    tpu.vector_store %arg10[%c0_26, %c0_27], %38 {strides = array<i32>} : memref<8x128xf32, #tpu.memory_space<vmem>>, vector<8x128xf32>,
    return
  }
  func.func @transform_0(%arg0: i32) -> (i32, i32) {
    %c0_i32 = arith.constant 0 : i32
    %c0_i32_0 = arith.constant 0 : i32
    return %arg0, %c0_i32 : i32, i32
  }
  func.func @transform_1(%arg0: i32) -> (i32, i32) {
    %c0_i32 = arith.constant 0 : i32
    %c0_i32_0 = arith.constant 0 : i32
    %c0_i32_1 = arith.constant 0 : i32
    return %c0_i32, %c0_i32_0 : i32, i32
  }
  func.func @transform_2(%arg0: i32) -> (i32, i32) {
    %c0_i32 = arith.constant 0 : i32
    %c0_i32_0 = arith.constant 0 : i32
    %c0_i32_1 = arith.constant 0 : i32
    return %c0_i32, %c0_i32_0 : i32, i32
  }
  func.func @transform_3(%arg0: i32) -> (i32, i32) {
    %c0_i32 = arith.constant 0 : i32
    %c0_i32_0 = arith.constant 0 : i32
    %c0_i32_1 = arith.constant 0 : i32
    return %c0_i32, %c0_i32_0 : i32, i32
  }
  func.func @transform_4(%arg0: i32) -> (i32, i32) {
    %c0_i32 = arith.constant 0 : i32
    %c0_i32_0 = arith.constant 0 : i32
    %c0_i32_1 = arith.constant 0 : i32
    return %c0_i32, %c0_i32_0 : i32, i32
  }
  func.func @transform_5(%arg0: i32) -> (i32, i32) {
    %c0_i32 = arith.constant 0 : i32
    %c0_i32_0 = arith.constant 0 : i32
    %c0_i32_1 = arith.constant 0 : i32
    return %c0_i32, %c0_i32_0 : i32, i32
  }
  func.func @transform_6(%arg0: i32) -> (i32, i32) {
    %c0_i32 = arith.constant 0 : i32
    %c0_i32_0 = arith.constant 0 : i32
    %c0_i32_1 = arith.constant 0 : i32
    return %c0_i32, %c0_i32_0 : i32, i32
  }
  func.func @transform_7(%arg0: i32) -> (i32, i32) {
    %c0_i32 = arith.constant 0 : i32
    %c0_i32_0 = arith.constant 0 : i32
    %c0_i32_1 = arith.constant 0 : i32
    return %c0_i32, %c0_i32_0 : i32, i32
  }
  func.func @transform_8(%arg0: i32) -> (i32, i32) {
    %c0_i32 = arith.constant 0 : i32
    %c0_i32_0 = arith.constant 0 : i32
    %c0_i32_1 = arith.constant 0 : i32
    return %c0_i32, %c0_i32_0 : i32, i32
  }
  func.func @transform_9(%arg0: i32) -> (i32, i32) {
    %c0_i32 = arith.constant 0 : i32
    %c0_i32_0 = arith.constant 0 : i32
    return %arg0, %c0_i32 : i32, i32
  }
}

</mosaic_0001>

<llo_original>
// kernel: tpu_custom_call.1
$region0: #{tpu_custom_call.1}
  #allocation0 [shape = 'u32[]', space=smem, size = 0x4, offset = 0x4, fixed_abs, tag = 'smem constant byte address 0x4 - core index']
  #allocation1 [shape = 'u32[144,128]{1,0:T(1,128)}', space=vmem, size = 0x12000, scoped, tag = 'internal scratch']
  %s0 = inlined_call_operand.vmem [shape: bf16[8,896], index: 0, kind: input, shape index: {}]
  %s1 = inlined_call_operand.hbm [shape: bf16[896,128], index: 1, kind: input, shape index: {}]
  %s2 = inlined_call_operand.vmem [shape: f32[1,128], index: 2, kind: input, shape index: {}]
  %s3 = inlined_call_operand.vmem [shape: bf16[128,64], index: 3, kind: input, shape index: {}]
  %s4 = inlined_call_operand.vmem [shape: f32[1,64], index: 4, kind: input, shape index: {}]
  %s5 = inlined_call_operand.vmem [shape: bf16[64,32], index: 5, kind: input, shape index: {}]
  %s6 = inlined_call_operand.vmem [shape: f32[1,32], index: 6, kind: input, shape index: {}]
  %s7 = inlined_call_operand.vmem [shape: bf16[32,128], index: 7, kind: input, shape index: {}]
  %s8 = inlined_call_operand.vmem [shape: f32[1,128], index: 8, kind: input, shape index: {}]
  %s9 = inlined_call_operand.hbm [shape: f32[8,128], index: 9, kind: output, shape index: {}]
  %s10 = sld [smem:[#allocation0]]
  $region50: #{tpu_custom_call.1} parent=0
    _
  %s12 = ssub.s32 1, %s10
  %s13 = scalar_select 0, %s12, %s10
  $region1: #{tpu_custom_call.1} parent=0
    #allocation2 [shape = 'u8[229376]{0}', space=vmem, size = 0x38000, scoped, tag = 'input window, operand 1, single buffered']
    #allocation3 [shape = 's32[1]{0}', space=sflag, size = 0x4, scoped, tag = 'scoped memory for tpu_custom_call.1']
    #allocation4 [shape = 's32[1]{0}', space=sflag, size = 0x4, scoped, tag = 'scoped memory for tpu_custom_call.1']
    #allocation5 [shape = 'u8[4096]{0}', space=vmem, size = 0x1000, scoped, tag = 'output window, operand 0, single buffered']
    %14 = vsyncpa [#allocation3], 0
    %15 = vsyncpa [#allocation4], 0
    // Predicated region
    $region2: #{tpu_custom_call.1} parent=1 // pred_check
      _
    $region3: #{tpu_custom_call.1} parent=1 // pred_check_branch
      %17 = sbr.rel (0) target = $region5
    $region4: #{tpu_custom_call.1} parent=1 // pred_region
      _
    $region5: #{tpu_custom_call.1} parent=1 // pred_fallthru
      _
    // Predicated region
    $region6: #{tpu_custom_call.1} parent=1 // pred_check
      _
    $region7: #{tpu_custom_call.1} parent=1 // pred_check_branch
      %19 = sbr.rel (0) target = $region9
    $region8: #{tpu_custom_call.1} parent=1 // pred_region
      %s21 = ssub.s32 7168, 7168
      %22 = vsyncadd [#allocation3], %s21
      %s23 = sshll.u32 [#allocation2], 4
      %s24 = int_to_ptr.vmem [resolvable:$true] %s23
      %29 = dma.hbm_to_vmem [thread:$0]  %s1, 7168, %s24, [#allocation3], 64, 64, 4
    $region9: #{tpu_custom_call.1} parent=1 // pred_fallthru
      _
    // Predicated region
    $region10: #{tpu_custom_call.1} parent=1 // pred_check
      _
    $region11: #{tpu_custom_call.1} parent=1 // pred_check_branch
      %31 = sbr.rel (0) target = $region13
    $region12: #{tpu_custom_call.1} parent=1 // pred_region
      _
    $region13: #{tpu_custom_call.1} parent=1 // pred_fallthru
      _
    // Predicated region
    $region14: #{tpu_custom_call.1} parent=1 // pred_check
      _
    $region15: #{tpu_custom_call.1} parent=1 // pred_check_branch
      %33 = sbr.rel (0) target = $region17
    $region16: #{tpu_custom_call.1} parent=1 // pred_region
      _
    $region17: #{tpu_custom_call.1} parent=1 // pred_fallthru
      _
    // Predicated region
    $region18: #{tpu_custom_call.1} parent=1 // pred_check
      _
    $region19: #{tpu_custom_call.1} parent=1 // pred_check_branch
      %35 = sbr.rel (0) target = $region21
    $region20: #{tpu_custom_call.1} parent=1 // pred_region
      _
    $region21: #{tpu_custom_call.1} parent=1 // pred_fallthru
      _
    // Predicated region
    $region22: #{tpu_custom_call.1} parent=1 // pred_check
      _
    $region23: #{tpu_custom_call.1} parent=1 // pred_check_branch
      %37 = sbr.rel (0) target = $region25
    $region24: #{tpu_custom_call.1} parent=1 // pred_region
      _
    $region25: #{tpu_custom_call.1} parent=1 // pred_fallthru
      _
    // Predicated region
    $region26: #{tpu_custom_call.1} parent=1 // pred_check
      _
    $region27: #{tpu_custom_call.1} parent=1 // pred_check_branch
      %39 = sbr.rel (0) target = $region29
    $region28: #{tpu_custom_call.1} parent=1 // pred_region
      _
    $region29: #{tpu_custom_call.1} parent=1 // pred_fallthru
      _
    // Predicated region
    $region30: #{tpu_custom_call.1} parent=1 // pred_check
      _
    $region31: #{tpu_custom_call.1} parent=1 // pred_check_branch
      %41 = sbr.rel (0) target = $region33
    $region32: #{tpu_custom_call.1} parent=1 // pred_region
      _
    $region33: #{tpu_custom_call.1} parent=1 // pred_fallthru
      _
    // Predicated region
    $region34: #{tpu_custom_call.1} parent=1 // pred_check
      _
    $region35: #{tpu_custom_call.1} parent=1 // pred_check_branch
      %43 = sbr.rel (0) target = $region37
    $region36: #{tpu_custom_call.1} parent=1 // pred_region
      _
    $region37: #{tpu_custom_call.1} parent=1 // pred_fallthru
      _
    // Predicated region
    $region38: #{tpu_custom_call.1} parent=1 // pred_check
      _
    $region39: #{tpu_custom_call.1} parent=1 // pred_check_branch
      %45 = sbr.rel (0) target = $region41
    $region40: #{tpu_custom_call.1} parent=1 // pred_region
      %46 = dma.done [#allocation3], 7168
    $region41: #{tpu_custom_call.1} parent=1 // pred_fallthru
      _
    %v48 = vld [vmem:[%s0] sm:$0xff]
    %v49 = vld [vmem:[%s0 + $0x8] sm:$0xff]
    %v50 = vld [vmem:[%s0 + $0x10] sm:$0xff]
    %v51 = vld [vmem:[%s0 + $0x18] sm:$0xf]
    %v52 = vld [vmem:[#allocation2] sm:$0xf]
    %v53 = vld [vmem:[#allocation2 + $0x4] sm:$0xf]
    %v54 = vld [vmem:[#allocation2 + $0x8] sm:$0xf]
    %v55 = vld [vmem:[#allocation2 + $0xc] sm:$0xf]
    %v56 = vld [vmem:[#allocation2 + $0x10] sm:$0xf]
    %v57 = vld [vmem:[#allocation2 + $0x14] sm:$0xf]
    %v58 = vld [vmem:[#allocation2 + $0x18] sm:$0xf]
    %v59 = vld [vmem:[#allocation2 + $0x1c] sm:$0xf]
    %v60 = vld [vmem:[#allocation2 + $0x20] sm:$0xf]
    %v61 = vld [vmem:[#allocation2 + $0x24] sm:$0xf]
    %v62 = vld [vmem:[#allocation2 + $0x28] sm:$0xf]
    %v63 = vld [vmem:[#allocation2 + $0x2c] sm:$0xf]
    %v64 = vld [vmem:[#allocation2 + $0x30] sm:$0xf]
    %v65 = vld [vmem:[#allocation2 + $0x34] sm:$0xf]
    %v66 = vld [vmem:[#allocation2 + $0x38] sm:$0xf]
    %v67 = vld [vmem:[#allocation2 + $0x3c] sm:$0xf]
    %v68 = vld [vmem:[#allocation2 + $0x40] sm:$0xf]
    %v69 = vld [vmem:[#allocation2 + $0x44] sm:$0xf]
    %v70 = vld [vmem:[#allocation2 + $0x48] sm:$0xf]
    %v71 = vld [vmem:[#allocation2 + $0x4c] sm:$0xf]
    %v72 = vld [vmem:[#allocation2 + $0x50] sm:$0xf]
    %v73 = vld [vmem:[#allocation2 + $0x54] sm:$0xf]
    %v74 = vld [vmem:[#allocation2 + $0x58] sm:$0xf]
    %v75 = vld [vmem:[#allocation2 + $0x5c] sm:$0xf]
    %v76 = vld [vmem:[#allocation2 + $0x60] sm:$0xf]
    %v77 = vld [vmem:[#allocation2 + $0x64] sm:$0xf]
    %v78 = vld [vmem:[#allocation2 + $0x68] sm:$0xf]
    %v79 = vld [vmem:[#allocation2 + $0x6c] sm:$0xf]
    %v80 = vld [vmem:[#allocation2 + $0x70] sm:$0xf]
    %v81 = vld [vmem:[#allocation2 + $0x74] sm:$0xf]
    %v82 = vld [vmem:[#allocation2 + $0x78] sm:$0xf]
    %v83 = vld [vmem:[#allocation2 + $0x7c] sm:$0xf]
    %v84 = vld [vmem:[#allocation2 + $0x80] sm:$0xf]
    %v85 = vld [vmem:[#allocation2 + $0x84] sm:$0xf]
    %v86 = vld [vmem:[#allocation2 + $0x88] sm:$0xf]
    %v87 = vld [vmem:[#allocation2 + $0x8c] sm:$0xf]
    %v88 = vld [vmem:[#allocation2 + $0x90] sm:$0xf]
    %v89 = vld [vmem:[#allocation2 + $0x94] sm:$0xf]
    %v90 = vld [vmem:[#allocation2 + $0x98] sm:$0xf]
    %v91 = vld [vmem:[#allocation2 + $0x9c] sm:$0xf]
    %v92 = vld [vmem:[#allocation2 + $0xa0] sm:$0xf]
    %v93 = vld [vmem:[#allocation2 + $0xa4] sm:$0xf]
    %v94 = vld [vmem:[#allocation2 + $0xa8] sm:$0xf]
    %v95 = vld [vmem:[#allocation2 + $0xac] sm:$0xf]
    %v96 = vld [vmem:[#allocation2 + $0xb0] sm:$0xf]
    %v97 = vld [vmem:[#allocation2 + $0xb4] sm:$0xf]
    %v98 = vld [vmem:[#allocation2 + $0xb8] sm:$0xf]
    %v99 = vld [vmem:[#allocation2 + $0xbc] sm:$0xf]
    %v100 = vld [vmem:[#allocation2 + $0xc0] sm:$0xf]
    %v101 = vld [vmem:[#allocation2 + $0xc4] sm:$0xf]
    %v102 = vld [vmem:[#allocation2 + $0xc8] sm:$0xf]
    %v103 = vld [vmem:[#allocation2 + $0xcc] sm:$0xf]
    %v104 = vld [vmem:[#allocation2 + $0xd0] sm:$0xf]
    %v105 = vld [vmem:[#allocation2 + $0xd4] sm:$0xf]
    %v106 = vld [vmem:[#allocation2 + $0xd8] sm:$0xf]
    %v107 = vld [vmem:[#allocation2 + $0xdc] sm:$0xf]
    %v108 = vld [vmem:[#allocation2 + $0xe0] sm:$0xf]
    %v109 = vld [vmem:[#allocation2 + $0xe4] sm:$0xf]
    %v110 = vld [vmem:[#allocation2 + $0xe8] sm:$0xf]
    %v111 = vld [vmem:[#allocation2 + $0xec] sm:$0xf]
    %v112 = vld [vmem:[#allocation2 + $0xf0] sm:$0xf]
    %v113 = vld [vmem:[#allocation2 + $0xf4] sm:$0xf]
    %v114 = vld [vmem:[#allocation2 + $0xf8] sm:$0xf]
    %v115 = vld [vmem:[#allocation2 + $0xfc] sm:$0xf]
    %v116 = vld [vmem:[#allocation2 + $0x100] sm:$0xf]
    %v117 = vld [vmem:[#allocation2 + $0x104] sm:$0xf]
    %v118 = vld [vmem:[#allocation2 + $0x108] sm:$0xf]
    %v119 = vld [vmem:[#allocation2 + $0x10c] sm:$0xf]
    %v120 = vld [vmem:[#allocation2 + $0x110] sm:$0xf]
    %v121 = vld [vmem:[#allocation2 + $0x114] sm:$0xf]
    %v122 = vld [vmem:[#allocation2 + $0x118] sm:$0xf]
    %v123 = vld [vmem:[#allocation2 + $0x11c] sm:$0xf]
    %v124 = vld [vmem:[#allocation2 + $0x120] sm:$0xf]
    %v125 = vld [vmem:[#allocation2 + $0x124] sm:$0xf]
    %v126 = vld [vmem:[#allocation2 + $0x128] sm:$0xf]
    %v127 = vld [vmem:[#allocation2 + $0x12c] sm:$0xf]
    %v128 = vld [vmem:[#allocation2 + $0x130] sm:$0xf]
    %v129 = vld [vmem:[#allocation2 + $0x134] sm:$0xf]
    %v130 = vld [vmem:[#allocation2 + $0x138] sm:$0xf]
    %v131 = vld [vmem:[#allocation2 + $0x13c] sm:$0xf]
    %v132 = vld [vmem:[#allocation2 + $0x140] sm:$0xf]
    %v133 = vld [vmem:[#allocation2 + $0x144] sm:$0xf]
    %v134 = vld [vmem:[#allocation2 + $0x148] sm:$0xf]
    %v135 = vld [vmem:[#allocation2 + $0x14c] sm:$0xf]
    %v136 = vld [vmem:[#allocation2 + $0x150] sm:$0xf]
    %v137 = vld [vmem:[#allocation2 + $0x154] sm:$0xf]
    %v138 = vld [vmem:[#allocation2 + $0x158] sm:$0xf]
    %v139 = vld [vmem:[#allocation2 + $0x15c] sm:$0xf]
    %v140 = vld [vmem:[#allocation2 + $0x160] sm:$0xf]
    %v141 = vld [vmem:[#allocation2 + $0x164] sm:$0xf]
    %v142 = vld [vmem:[#allocation2 + $0x168] sm:$0xf]
    %v143 = vld [vmem:[#allocation2 + $0x16c] sm:$0xf]
    %v144 = vld [vmem:[#allocation2 + $0x170] sm:$0xf]
    %v145 = vld [vmem:[#allocation2 + $0x174] sm:$0xf]
    %v146 = vld [vmem:[#allocation2 + $0x178] sm:$0xf]
    %v147 = vld [vmem:[#allocation2 + $0x17c] sm:$0xf]
    %v148 = vld [vmem:[#allocation2 + $0x180] sm:$0xf]
    %v149 = vld [vmem:[#allocation2 + $0x184] sm:$0xf]
    %v150 = vld [vmem:[#allocation2 + $0x188] sm:$0xf]
    %v151 = vld [vmem:[#allocation2 + $0x18c] sm:$0xf]
    %v152 = vld [vmem:[#allocation2 + $0x190] sm:$0xf]
    %v153 = vld [vmem:[#allocation2 + $0x194] sm:$0xf]
    %v154 = vld [vmem:[#allocation2 + $0x198] sm:$0xf]
    %v155 = vld [vmem:[#allocation2 + $0x19c] sm:$0xf]
    %v156 = vld [vmem:[#allocation2 + $0x1a0] sm:$0xf]
    %v157 = vld [vmem:[#allocation2 + $0x1a4] sm:$0xf]
    %v158 = vld [vmem:[#allocation2 + $0x1a8] sm:$0xf]
    %v159 = vld [vmem:[#allocation2 + $0x1ac] sm:$0xf]
    %v160 = vld [vmem:[#allocation2 + $0x1b0] sm:$0xf]
    %v161 = vld [vmem:[#allocation2 + $0x1b4] sm:$0xf]
    %v162 = vld [vmem:[#allocation2 + $0x1b8] sm:$0xf]
    %v163 = vld [vmem:[#allocation2 + $0x1bc] sm:$0xf]
    %v164 = vld [vmem:[%s2] sm:$0x1]
    %v166 = vlaneseq
    %v167 = vshrl.u32 %v166, 7
    %v168 = vsub.s32 0, %v167
    %v169 = vrot.slane %v164, %v168
    %v175 = vunpack.c.l.b16 %v48
    %v176 = vunpack.c.h.b16 %v48
    %v177 = vunpack.c.l.b16 %v49
    %v178 = vunpack.c.h.b16 %v49
    %v179 = vunpack.c.l.b16 %v50
    %v180 = vunpack.c.h.b16 %v50
    %v181 = vunpack.c.l.b16 %v51
    %v182 = vpack.c.b16 %v175, %v175
    %v183 = vpack.c.b16 %v176, %v176
    %v184 = vpack.c.b16 %v177, %v177
    %v185 = vpack.c.b16 %v178, %v178
    %v186 = vpack.c.b16 %v179, %v179
    %v187 = vpack.c.b16 %v180, %v180
    %v188 = vpack.c.b16 %v181, %v181
    %v308 = vunpack.c.l.b16 %v52
    %v309 = vunpack.c.l.b16 %v53
    %v310 = vunpack.c.l.b16 %v54
    %v311 = vunpack.c.l.b16 %v55
    %v312 = vunpack.c.l.b16 %v56
    %v313 = vunpack.c.l.b16 %v57
    %v314 = vunpack.c.l.b16 %v58
    %v315 = vunpack.c.l.b16 %v59
    %v316 = vunpack.c.l.b16 %v60
    %v317 = vunpack.c.l.b16 %v61
    %v318 = vunpack.c.l.b16 %v62
    %v319 = vunpack.c.l.b16 %v63
    %v320 = vunpack.c.l.b16 %v64
    %v321 = vunpack.c.l.b16 %v65
    %v322 = vunpack.c.l.b16 %v66
    %v323 = vunpack.c.l.b16 %v67
    %v324 = vunpack.c.l.b16 %v68
    %v325 = vunpack.c.l.b16 %v69
    %v326 = vunpack.c.l.b16 %v70
    %v327 = vunpack.c.l.b16 %v71
    %v328 = vunpack.c.l.b16 %v72
    %v329 = vunpack.c.l.b16 %v73
    %v330 = vunpack.c.l.b16 %v74
    %v331 = vunpack.c.l.b16 %v75
    %v332 = vunpack.c.l.b16 %v76
    %v333 = vunpack.c.l.b16 %v77
    %v334 = vunpack.c.l.b16 %v78
    %v335 = vunpack.c.l.b16 %v79
    %v336 = vunpack.c.l.b16 %v80
    %v337 = vunpack.c.l.b16 %v81
    %v338 = vunpack.c.l.b16 %v82
    %v339 = vunpack.c.l.b16 %v83
    %v340 = vunpack.c.l.b16 %v84
    %v341 = vunpack.c.l.b16 %v85
    %v342 = vunpack.c.l.b16 %v86
    %v343 = vunpack.c.l.b16 %v87
    %v344 = vunpack.c.l.b16 %v88
    %v345 = vunpack.c.l.b16 %v89
    %v346 = vunpack.c.l.b16 %v90
    %v347 = vunpack.c.l.b16 %v91
    %v348 = vunpack.c.l.b16 %v92
    %v349 = vunpack.c.l.b16 %v93
    %v350 = vunpack.c.l.b16 %v94
    %v351 = vunpack.c.l.b16 %v95
    %v352 = vunpack.c.l.b16 %v96
    %v353 = vunpack.c.l.b16 %v97
    %v354 = vunpack.c.l.b16 %v98
    %v355 = vunpack.c.l.b16 %v99
    %v356 = vunpack.c.l.b16 %v100
    %v357 = vunpack.c.l.b16 %v101
    %v358 = vunpack.c.l.b16 %v102
    %v359 = vunpack.c.l.b16 %v103
    %v360 = vunpack.c.l.b16 %v104
    %v361 = vunpack.c.l.b16 %v105
    %v362 = vunpack.c.l.b16 %v106
    %v363 = vunpack.c.l.b16 %v107
    %v364 = vunpack.c.l.b16 %v108
    %v365 = vunpack.c.l.b16 %v109
    %v366 = vunpack.c.l.b16 %v110
    %v367 = vunpack.c.l.b16 %v111
    %v368 = vunpack.c.l.b16 %v112
    %v369 = vunpack.c.l.b16 %v113
    %v370 = vunpack.c.l.b16 %v114
    %v371 = vunpack.c.l.b16 %v115
    %v372 = vunpack.c.l.b16 %v116
    %v373 = vunpack.c.l.b16 %v117
    %v374 = vunpack.c.l.b16 %v118
    %v375 = vunpack.c.l.b16 %v119
    %v376 = vunpack.c.l.b16 %v120
    %v377 = vunpack.c.l.b16 %v121
    %v378 = vunpack.c.l.b16 %v122
    %v379 = vunpack.c.l.b16 %v123
    %v380 = vunpack.c.l.b16 %v124
    %v381 = vunpack.c.l.b16 %v125
    %v382 = vunpack.c.l.b16 %v126
    %v383 = vunpack.c.l.b16 %v127
    %v384 = vunpack.c.l.b16 %v128
    %v385 = vunpack.c.l.b16 %v129
    %v386 = vunpack.c.l.b16 %v130
    %v387 = vunpack.c.l.b16 %v131
    %v388 = vunpack.c.l.b16 %v132
    %v389 = vunpack.c.l.b16 %v133
    %v390 = vunpack.c.l.b16 %v134
    %v391 = vunpack.c.l.b16 %v135
    %v392 = vunpack.c.l.b16 %v136
    %v393 = vunpack.c.l.b16 %v137
    %v394 = vunpack.c.l.b16 %v138
    %v395 = vunpack.c.l.b16 %v139
    %v396 = vunpack.c.l.b16 %v140
    %v397 = vunpack.c.l.b16 %v141
    %v398 = vunpack.c.l.b16 %v142
    %v399 = vunpack.c.l.b16 %v143
    %v400 = vunpack.c.l.b16 %v144
    %v401 = vunpack.c.l.b16 %v145
    %v402 = vunpack.c.l.b16 %v146
    %v403 = vunpack.c.l.b16 %v147
    %v404 = vunpack.c.l.b16 %v148
    %v405 = vunpack.c.l.b16 %v149
    %v406 = vunpack.c.l.b16 %v150
    %v407 = vunpack.c.l.b16 %v151
    %v408 = vunpack.c.l.b16 %v152
    %v409 = vunpack.c.l.b16 %v153
    %v410 = vunpack.c.l.b16 %v154
    %v411 = vunpack.c.l.b16 %v155
    %v412 = vunpack.c.l.b16 %v156
    %v413 = vunpack.c.l.b16 %v157
    %v414 = vunpack.c.l.b16 %v158
    %v415 = vunpack.c.l.b16 %v159
    %v416 = vunpack.c.l.b16 %v160
    %v417 = vunpack.c.l.b16 %v161
    %v418 = vunpack.c.l.b16 %v162
    %v419 = vunpack.c.l.b16 %v163
    %v420 = vpack.c.b16 %v309, %v308
    %v421 = vpack.c.b16 %v311, %v310
    %v422 = vpack.c.b16 %v313, %v312
    %v423 = vpack.c.b16 %v315, %v314
    %v424 = vpack.c.b16 %v317, %v316
    %v425 = vpack.c.b16 %v319, %v318
    %v426 = vpack.c.b16 %v321, %v320
    %v427 = vpack.c.b16 %v323, %v322
    %v428 = vpack.c.b16 %v325, %v324
    %v429 = vpack.c.b16 %v327, %v326
    %v430 = vpack.c.b16 %v329, %v328
    %v431 = vpack.c.b16 %v331, %v330
    %v432 = vpack.c.b16 %v333, %v332
    %v433 = vpack.c.b16 %v335, %v334
    %v434 = vpack.c.b16 %v337, %v336
    %v435 = vpack.c.b16 %v339, %v338
    %v436 = vpack.c.b16 %v341, %v340
    %v437 = vpack.c.b16 %v343, %v342
    %v438 = vpack.c.b16 %v345, %v344
    %v439 = vpack.c.b16 %v347, %v346
    %v440 = vpack.c.b16 %v349, %v348
    %v441 = vpack.c.b16 %v351, %v350
    %v442 = vpack.c.b16 %v353, %v352
    %v443 = vpack.c.b16 %v355, %v354
    %v444 = vpack.c.b16 %v357, %v356
    %v445 = vpack.c.b16 %v359, %v358
    %v446 = vpack.c.b16 %v361, %v360
    %v447 = vpack.c.b16 %v363, %v362
    %v448 = vpack.c.b16 %v365, %v364
    %v449 = vpack.c.b16 %v367, %v366
    %v450 = vpack.c.b16 %v369, %v368
    %v451 = vpack.c.b16 %v371, %v370
    %v452 = vpack.c.b16 %v373, %v372
    %v453 = vpack.c.b16 %v375, %v374
    %v454 = vpack.c.b16 %v377, %v376
    %v455 = vpack.c.b16 %v379, %v378
    %v456 = vpack.c.b16 %v381, %v380
    %v457 = vpack.c.b16 %v383, %v382
    %v458 = vpack.c.b16 %v385, %v384
    %v459 = vpack.c.b16 %v387, %v386
    %v460 = vpack.c.b16 %v389, %v388
    %v461 = vpack.c.b16 %v391, %v390
    %v462 = vpack.c.b16 %v393, %v392
    %v463 = vpack.c.b16 %v395, %v394
    %v464 = vpack.c.b16 %v397, %v396
    %v465 = vpack.c.b16 %v399, %v398
    %v466 = vpack.c.b16 %v401, %v400
    %v467 = vpack.c.b16 %v403, %v402
    %v468 = vpack.c.b16 %v405, %v404
    %v469 = vpack.c.b16 %v407, %v406
    %v470 = vpack.c.b16 %v409, %v408
    %v471 = vpack.c.b16 %v411, %v410
    %v472 = vpack.c.b16 %v413, %v412
    %v473 = vpack.c.b16 %v415, %v414
    %v474 = vpack.c.b16 %v417, %v416
    %v475 = vpack.c.b16 %v419, %v418
    %532 = vmatprep.subr.bf16.mxu0 0
    %533 = vmatpush1.bf16.msra.mxu0 %v420
    %534 = vmatprep.subr.bf16.mxu0 0
    %535 = vmatpush1.bf16.msra.mxu0 %v421
    %536 = vmatprep.subr.bf16.mxu0 0
    %537 = vmatpush1.bf16.msra.mxu0 %v422
    %538 = vmatprep.subr.bf16.mxu0 0
    %539 = vmatpush1.bf16.msra.mxu0 %v423
    %540 = vmatprep.subr.bf16.mxu0 0
    %541 = vmatpush1.bf16.msra.mxu0 %v424
    %542 = vmatprep.subr.bf16.mxu0 0
    %543 = vmatpush1.bf16.msra.mxu0 %v425
    %544 = vmatprep.subr.bf16.mxu0 0
    %545 = vmatpush1.bf16.msra.mxu0 %v426
    %546 = vmatprep.subr.bf16.mxu0 0
    %547 = vmatpush1.bf16.msra.mxu0 %v427
    %548 = vmatprep.subr.bf16.mxu0 0
    %549 = vmatpush1.bf16.msra.mxu0 %v428
    %550 = vmatprep.subr.bf16.mxu0 0
    %551 = vmatpush1.bf16.msra.mxu0 %v429
    %552 = vmatprep.subr.bf16.mxu0 0
    %553 = vmatpush1.bf16.msra.mxu0 %v430
    %554 = vmatprep.subr.bf16.mxu0 0
    %555 = vmatpush1.bf16.msra.mxu0 %v431
    %556 = vmatprep.subr.bf16.mxu0 0
    %557 = vmatpush1.bf16.msra.mxu0 %v432
    %558 = vmatprep.subr.bf16.mxu0 0
    %559 = vmatpush1.bf16.msra.mxu0 %v433
    %560 = vmatprep.subr.bf16.mxu0 0
    %561 = vmatpush1.bf16.msra.mxu0 %v434
    %562 = vmatprep.subr.bf16.mxu0 0
    %563 = vmatpush1.bf16.msra.mxu0 %v435
    %564 = vmatprep.mubr.bf16.mxu0 %v183
    %565 = vmatmul.mubr.bf16.gmra.mrb[0].mxu0 %v182
    %v566 = vpop.f32.mrb[0].mxu0
    %v567 = vadd.f32 %v169, %v566
    %v568 = vpop.f32.mrb[0].mxu0
    %v569 = vpop.f32.mrb[0].mxu0
    %v570 = vpop.f32.mrb[0].mxu0
    %571 = vdwg.mxu0
    %572 = vmatprep.subr.bf16.mxu0 0
    %573 = vmatpush1.bf16.msra.mxu0 %v436
    %574 = vmatprep.subr.bf16.mxu0 0
    %575 = vmatpush1.bf16.msra.mxu0 %v437
    %576 = vmatprep.subr.bf16.mxu0 0
    %577 = vmatpush1.bf16.msra.mxu0 %v438
    %578 = vmatprep.subr.bf16.mxu0 0
    %579 = vmatpush1.bf16.msra.mxu0 %v439
    %580 = vmatprep.subr.bf16.mxu0 0
    %581 = vmatpush1.bf16.msra.mxu0 %v440
    %582 = vmatprep.subr.bf16.mxu0 0
    %583 = vmatpush1.bf16.msra.mxu0 %v441
    %584 = vmatprep.subr.bf16.mxu0 0
    %585 = vmatpush1.bf16.msra.mxu0 %v442
    %586 = vmatprep.subr.bf16.mxu0 0
    %587 = vmatpush1.bf16.msra.mxu0 %v443
    %588 = vmatprep.subr.bf16.mxu0 0
    %589 = vmatpush1.bf16.msra.mxu0 %v444
    %590 = vmatprep.subr.bf16.mxu0 0
    %591 = vmatpush1.bf16.msra.mxu0 %v445
    %592 = vmatprep.subr.bf16.mxu0 0
    %593 = vmatpush1.bf16.msra.mxu0 %v446
    %594 = vmatprep.subr.bf16.mxu0 0
    %595 = vmatpush1.bf16.msra.mxu0 %v447
    %596 = vmatprep.subr.bf16.mxu0 0
    %597 = vmatpush1.bf16.msra.mxu0 %v448
    %598 = vmatprep.subr.bf16.mxu0 0
    %599 = vmatpush1.bf16.msra.mxu0 %v449
    %600 = vmatprep.subr.bf16.mxu0 0
    %601 = vmatpush1.bf16.msra.mxu0 %v450
    %602 = vmatprep.subr.bf16.mxu0 0
    %603 = vmatpush1.bf16.msra.mxu0 %v451
    %604 = vmatprep.mubr.bf16.mxu0 %v185
    %605 = vmatmul.mubr.bf16.gmra.mrb[0].mxu0 %v184
    %v606 = vpop.f32.mrb[0].mxu0
    %v607 = vadd.f32 %v567, %v606
    %v608 = vpop.f32.mrb[0].mxu0
    %v609 = vpop.f32.mrb[0].mxu0
    %v610 = vpop.f32.mrb[0].mxu0
    %611 = vdwg.mxu0
    %612 = vmatprep.subr.bf16.mxu0 0
    %613 = vmatpush1.bf16.msra.mxu0 %v452
    %614 = vmatprep.subr.bf16.mxu0 0
    %615 = vmatpush1.bf16.msra.mxu0 %v453
    %616 = vmatprep.subr.bf16.mxu0 0
    %617 = vmatpush1.bf16.msra.mxu0 %v454
    %618 = vmatprep.subr.bf16.mxu0 0
    %619 = vmatpush1.bf16.msra.mxu0 %v455
    %620 = vmatprep.subr.bf16.mxu0 0
    %621 = vmatpush1.bf16.msra.mxu0 %v456
    %622 = vmatprep.subr.bf16.mxu0 0
    %623 = vmatpush1.bf16.msra.mxu0 %v457
    %624 = vmatprep.subr.bf16.mxu0 0
    %625 = vmatpush1.bf16.msra.mxu0 %v458
    %626 = vmatprep.subr.bf16.mxu0 0
    %627 = vmatpush1.bf16.msra.mxu0 %v459
    %628 = vmatprep.subr.bf16.mxu0 0
    %629 = vmatpush1.bf16.msra.mxu0 %v460
    %630 = vmatprep.subr.bf16.mxu0 0
    %631 = vmatpush1.bf16.msra.mxu0 %v461
    %632 = vmatprep.subr.bf16.mxu0 0
    %633 = vmatpush1.bf16.msra.mxu0 %v462
    %634 = vmatprep.subr.bf16.mxu0 0
    %635 = vmatpush1.bf16.msra.mxu0 %v463
    %636 = vmatprep.subr.bf16.mxu0 0
    %637 = vmatpush1.bf16.msra.mxu0 %v464
    %638 = vmatprep.subr.bf16.mxu0 0
    %639 = vmatpush1.bf16.msra.mxu0 %v465
    %640 = vmatprep.subr.bf16.mxu0 0
    %641 = vmatpush1.bf16.msra.mxu0 %v466
    %642 = vmatprep.subr.bf16.mxu0 0
    %643 = vmatpush1.bf16.msra.mxu0 %v467
    %644 = vmatprep.mubr.bf16.mxu0 %v187
    %645 = vmatmul.mubr.bf16.gmra.mrb[0].mxu0 %v186
    %v646 = vpop.f32.mrb[0].mxu0
    %v647 = vadd.f32 %v607, %v646
    %v648 = vpop.f32.mrb[0].mxu0
    %v649 = vpop.f32.mrb[0].mxu0
    %v650 = vpop.f32.mrb[0].mxu0
    %651 = vdwg.mxu0
    %652 = vmatprep.subr.bf16.mxu0 0
    %653 = vmatpush1.bf16.msra.mxu0 %v468
    %654 = vmatprep.subr.bf16.mxu0 0
    %655 = vmatpush1.bf16.msra.mxu0 %v469
    %656 = vmatprep.subr.bf16.mxu0 0
    %657 = vmatpush1.bf16.msra.mxu0 %v470
    %658 = vmatprep.subr.bf16.mxu0 0
    %659 = vmatpush1.bf16.msra.mxu0 %v471
    %660 = vmatprep.subr.bf16.mxu0 0
    %661 = vmatpush1.bf16.msra.mxu0 %v472
    %662 = vmatprep.subr.bf16.mxu0 0
    %663 = vmatpush1.bf16.msra.mxu0 %v473
    %664 = vmatprep.subr.bf16.mxu0 0
    %665 = vmatpush1.bf16.msra.mxu0 %v474
    %666 = vmatprep.subr.bf16.mxu0 0
    %667 = vmatpush1.bf16.msra.mxu0 %v475
    %668 = vmatprep.subr.bf16.mxu0 0
    %669 = vmatpush1.bf16.msra.mxu0 0
    %670 = vmatprep.subr.bf16.mxu0 0
    %671 = vmatpush1.bf16.msra.mxu0 0
    %672 = vmatprep.subr.bf16.mxu0 0
    %673 = vmatpush1.bf16.msra.mxu0 0
    %674 = vmatprep.subr.bf16.mxu0 0
    %675 = vmatpush1.bf16.msra.mxu0 0
    %676 = vmatprep.subr.bf16.mxu0 0
    %677 = vmatpush1.bf16.msra.mxu0 0
    %678 = vmatprep.subr.bf16.mxu0 0
    %679 = vmatpush1.bf16.msra.mxu0 0
    %680 = vmatprep.subr.bf16.mxu0 0
    %681 = vmatpush1.bf16.msra.mxu0 0
    %682 = vmatprep.subr.bf16.mxu0 0
    %683 = vmatpush1.bf16.msra.mxu0 0
    %684 = vmatprep.mubr.bf16.mxu0 0
    %685 = vmatmul.mubr.bf16.gmra.mrb[0].mxu0 %v188
    %v686 = vpop.f32.mrb[0].mxu0
    %v687 = vadd.f32 %v647, %v686
    %v688 = vpop.f32.mrb[0].mxu0
    %v689 = vpop.f32.mrb[0].mxu0
    %v690 = vpop.f32.mrb[0].mxu0
    %691 = vdwg.mxu0
    %vm692 = vcmp.gt.f32.partialorder %v687, 0.0
    %v693 = vmul.f32 %v687, 0.2
    %v694 = vsel %vm692, %v687, %v693
    %v695 = vpack.c.bf16 %v694, %v694
    %v696 = vld [vmem:[%s3] sm:$0xf]
    %v697 = vld [vmem:[%s3 + $0x4] sm:$0xf]
    %v698 = vld [vmem:[%s3 + $0x8] sm:$0xf]
    %v699 = vld [vmem:[%s3 + $0xc] sm:$0xf]
    %v700 = vld [vmem:[%s3 + $0x10] sm:$0xf]
    %v701 = vld [vmem:[%s3 + $0x14] sm:$0xf]
    %v702 = vld [vmem:[%s3 + $0x18] sm:$0xf]
    %v703 = vld [vmem:[%s3 + $0x1c] sm:$0xf]
    %v704 = vld [vmem:[%s3 + $0x20] sm:$0xf]
    %v705 = vld [vmem:[%s3 + $0x24] sm:$0xf]
    %v706 = vld [vmem:[%s3 + $0x28] sm:$0xf]
    %v707 = vld [vmem:[%s3 + $0x2c] sm:$0xf]
    %v708 = vld [vmem:[%s3 + $0x30] sm:$0xf]
    %v709 = vld [vmem:[%s3 + $0x34] sm:$0xf]
    %v710 = vld [vmem:[%s3 + $0x38] sm:$0xf]
    %v711 = vld [vmem:[%s3 + $0x3c] sm:$0xf]
    %v712 = vld [vmem:[%s4] sm:$0x1]
    %v714 = vlaneseq
    %v715 = vshrl.u32 %v714, 7
    %v716 = vsub.s32 0, %v715
    %v717 = vrot.slane %v712, %v716
    %v735 = vunpack.c.l.b16 %v696
    %v736 = vunpack.c.l.b16 %v697
    %v737 = vunpack.c.l.b16 %v698
    %v738 = vunpack.c.l.b16 %v699
    %v739 = vunpack.c.l.b16 %v700
    %v740 = vunpack.c.l.b16 %v701
    %v741 = vunpack.c.l.b16 %v702
    %v742 = vunpack.c.l.b16 %v703
    %v743 = vunpack.c.l.b16 %v704
    %v744 = vunpack.c.l.b16 %v705
    %v745 = vunpack.c.l.b16 %v706
    %v746 = vunpack.c.l.b16 %v707
    %v747 = vunpack.c.l.b16 %v708
    %v748 = vunpack.c.l.b16 %v709
    %v749 = vunpack.c.l.b16 %v710
    %v750 = vunpack.c.l.b16 %v711
    %v751 = vpack.c.b16 %v736, %v735
    %v752 = vpack.c.b16 %v738, %v737
    %v753 = vpack.c.b16 %v740, %v739
    %v754 = vpack.c.b16 %v742, %v741
    %v755 = vpack.c.b16 %v744, %v743
    %v756 = vpack.c.b16 %v746, %v745
    %v757 = vpack.c.b16 %v748, %v747
    %v758 = vpack.c.b16 %v750, %v749
    %767 = vmatprep.subr.bf16.mxu0 0
    %768 = vmatpush1.bf16.msra.mxu0 %v751
    %769 = vmatprep.subr.bf16.mxu0 0
    %770 = vmatpush1.bf16.msra.mxu0 %v752
    %771 = vmatprep.subr.bf16.mxu0 0
    %772 = vmatpush1.bf16.msra.mxu0 %v753
    %773 = vmatprep.subr.bf16.mxu0 0
    %774 = vmatpush1.bf16.msra.mxu0 %v754
    %775 = vmatprep.subr.bf16.mxu0 0
    %776 = vmatpush1.bf16.msra.mxu0 %v755
    %777 = vmatprep.subr.bf16.mxu0 0
    %778 = vmatpush1.bf16.msra.mxu0 %v756
    %779 = vmatprep.subr.bf16.mxu0 0
    %780 = vmatpush1.bf16.msra.mxu0 %v757
    %781 = vmatprep.subr.bf16.mxu0 0
    %782 = vmatpush1.bf16.msra.mxu0 %v758
    %783 = vmatprep.subr.bf16.mxu0 0
    %784 = vmatpush1.bf16.msra.mxu0 0
    %785 = vmatprep.subr.bf16.mxu0 0
    %786 = vmatpush1.bf16.msra.mxu0 0
    %787 = vmatprep.subr.bf16.mxu0 0
    %788 = vmatpush1.bf16.msra.mxu0 0
    %789 = vmatprep.subr.bf16.mxu0 0
    %790 = vmatpush1.bf16.msra.mxu0 0
    %791 = vmatprep.subr.bf16.mxu0 0
    %792 = vmatpush1.bf16.msra.mxu0 0
    %793 = vmatprep.subr.bf16.mxu0 0
    %794 = vmatpush1.bf16.msra.mxu0 0
    %795 = vmatprep.subr.bf16.mxu0 0
    %796 = vmatpush1.bf16.msra.mxu0 0
    %797 = vmatprep.subr.bf16.mxu0 0
    %798 = vmatpush1.bf16.msra.mxu0 0
    %799 = vmatprep.mubr.bf16.mxu0 0
    %800 = vmatmul.mubr.bf16.gmra.mrb[0].mxu0 %v695
    %v801 = vpop.f32.mrb[0].mxu0
    %v802 = vadd.f32 %v717, %v801
    %v803 = vpop.f32.mrb[0].mxu0
    %v804 = vpop.f32.mrb[0].mxu0
    %v805 = vpop.f32.mrb[0].mxu0
    %806 = vdwg.mxu0
    %vm807 = vcmp.gt.f32.partialorder %v802, 0.0
    %v808 = vmul.f32 %v802, 0.2
    %v809 = vsel %vm807, %v802, %v808
    %v810 = vpack.c.bf16 %v809, %v809
    %v811 = vld [vmem:[%s5] sm:$0xf]
    %v812 = vld [vmem:[%s5 + $0x4] sm:$0xf]
    %v813 = vld [vmem:[%s5 + $0x8] sm:$0xf]
    %v814 = vld [vmem:[%s5 + $0xc] sm:$0xf]
    %v815 = vld [vmem:[%s5 + $0x10] sm:$0xf]
    %v816 = vld [vmem:[%s5 + $0x14] sm:$0xf]
    %v817 = vld [vmem:[%s5 + $0x18] sm:$0xf]
    %v818 = vld [vmem:[%s5 + $0x1c] sm:$0xf]
    %v819 = vld [vmem:[%s6] sm:$0x1]
    %v821 = vlaneseq
    %v822 = vshrl.u32 %v821, 7
    %v823 = vsub.s32 0, %v822
    %v824 = vrot.slane %v819, %v823
    %v834 = vunpack.c.l.b16 %v811
    %v835 = vunpack.c.l.b16 %v812
    %v836 = vunpack.c.l.b16 %v813
    %v837 = vunpack.c.l.b16 %v814
    %v838 = vunpack.c.l.b16 %v815
    %v839 = vunpack.c.l.b16 %v816
    %v840 = vunpack.c.l.b16 %v817
    %v841 = vunpack.c.l.b16 %v818
    %v842 = vpack.c.b16 %v835, %v834
    %v843 = vpack.c.b16 %v837, %v836
    %v844 = vpack.c.b16 %v839, %v838
    %v845 = vpack.c.b16 %v841, %v840
    %vm850 = vcmask 523264
    %v852 = vsel %vm850, %v810, 0
    %854 = vmatprep.subr.bf16.mxu0 0
    %855 = vmatpush1.bf16.msra.mxu0 %v842
    %856 = vmatprep.subr.bf16.mxu0 0
    %857 = vmatpush1.bf16.msra.mxu0 %v843
    %858 = vmatprep.subr.bf16.mxu0 0
    %859 = vmatpush1.bf16.msra.mxu0 %v844
    %860 = vmatprep.subr.bf16.mxu0 0
    %861 = vmatpush1.bf16.msra.mxu0 %v845
    %862 = vmatprep.subr.bf16.mxu0 0
    %863 = vmatpush1.bf16.msra.mxu0 0
    %864 = vmatprep.subr.bf16.mxu0 0
    %865 = vmatpush1.bf16.msra.mxu0 0
    %866 = vmatprep.subr.bf16.mxu0 0
    %867 = vmatpush1.bf16.msra.mxu0 0
    %868 = vmatprep.subr.bf16.mxu0 0
    %869 = vmatpush1.bf16.msra.mxu0 0
    %870 = vmatprep.subr.bf16.mxu0 0
    %871 = vmatpush1.bf16.msra.mxu0 0
    %872 = vmatprep.subr.bf16.mxu0 0
    %873 = vmatpush1.bf16.msra.mxu0 0
    %874 = vmatprep.subr.bf16.mxu0 0
    %875 = vmatpush1.bf16.msra.mxu0 0
    %876 = vmatprep.subr.bf16.mxu0 0
    %877 = vmatpush1.bf16.msra.mxu0 0
    %878 = vmatprep.subr.bf16.mxu0 0
    %879 = vmatpush1.bf16.msra.mxu0 0
    %880 = vmatprep.subr.bf16.mxu0 0
    %881 = vmatpush1.bf16.msra.mxu0 0
    %882 = vmatprep.subr.bf16.mxu0 0
    %883 = vmatpush1.bf16.msra.mxu0 0
    %884 = vmatprep.subr.bf16.mxu0 0
    %885 = vmatpush1.bf16.msra.mxu0 0
    %886 = vmatprep.mubr.bf16.mxu0 0
    %887 = vmatmul.mubr.bf16.gmra.mrb[0].mxu0 %v852
    %v888 = vpop.f32.mrb[0].mxu0
    %v889 = vadd.f32 %v824, %v888
    %v890 = vpop.f32.mrb[0].mxu0
    %v891 = vpop.f32.mrb[0].mxu0
    %v892 = vpop.f32.mrb[0].mxu0
    %893 = vdwg.mxu0
    %vm894 = vcmp.gt.f32.partialorder %v889, 0.0
    %v895 = vmul.f32 %v889, 0.2
    %v896 = vsel %vm894, %v889, %v895
    %v897 = vpack.c.bf16 %v896, %v896
    %v898 = vld [vmem:[%s7] sm:$0xf]
    %v899 = vld [vmem:[%s7 + $0x4] sm:$0xf]
    %v900 = vld [vmem:[%s7 + $0x8] sm:$0xf]
    %v901 = vld [vmem:[%s7 + $0xc] sm:$0xf]
    %v902 = vld [vmem:[%s8] sm:$0x1]
    %v904 = vlaneseq
    %v905 = vshrl.u32 %v904, 7
    %v906 = vsub.s32 0, %v905
    %v907 = vrot.slane %v902, %v906
    %v913 = vunpack.c.l.b16 %v898
    %v914 = vunpack.c.l.b16 %v899
    %v915 = vunpack.c.l.b16 %v900
    %v916 = vunpack.c.l.b16 %v901
    %v917 = vpack.c.b16 %v914, %v913
    %v918 = vpack.c.b16 %v916, %v915
    %vm921 = vcmask 261120
    %v923 = vsel %vm921, %v897, 0
    %925 = vmatprep.subr.bf16.mxu0 0
    %926 = vmatpush1.bf16.msra.mxu0 %v917
    %927 = vmatprep.subr.bf16.mxu0 0
    %928 = vmatpush1.bf16.msra.mxu0 %v918
    %929 = vmatprep.subr.bf16.mxu0 0
    %930 = vmatpush1.bf16.msra.mxu0 0
    %931 = vmatprep.subr.bf16.mxu0 0
    %932 = vmatpush1.bf16.msra.mxu0 0
    %933 = vmatprep.subr.bf16.mxu0 0
    %934 = vmatpush1.bf16.msra.mxu0 0
    %935 = vmatprep.subr.bf16.mxu0 0
    %936 = vmatpush1.bf16.msra.mxu0 0
    %937 = vmatprep.subr.bf16.mxu0 0
    %938 = vmatpush1.bf16.msra.mxu0 0
    %939 = vmatprep.subr.bf16.mxu0 0
    %940 = vmatpush1.bf16.msra.mxu0 0
    %941 = vmatprep.subr.bf16.mxu0 0
    %942 = vmatpush1.bf16.msra.mxu0 0
    %943 = vmatprep.subr.bf16.mxu0 0
    %944 = vmatpush1.bf16.msra.mxu0 0
    %945 = vmatprep.subr.bf16.mxu0 0
    %946 = vmatpush1.bf16.msra.mxu0 0
    %947 = vmatprep.subr.bf16.mxu0 0
    %948 = vmatpush1.bf16.msra.mxu0 0
    %949 = vmatprep.subr.bf16.mxu0 0
    %950 = vmatpush1.bf16.msra.mxu0 0
    %951 = vmatprep.subr.bf16.mxu0 0
    %952 = vmatpush1.bf16.msra.mxu0 0
    %953 = vmatprep.subr.bf16.mxu0 0
    %954 = vmatpush1.bf16.msra.mxu0 0
    %955 = vmatprep.subr.bf16.mxu0 0
    %956 = vmatpush1.bf16.msra.mxu0 0
    %957 = vmatprep.mubr.bf16.mxu0 0
    %958 = vmatmul.mubr.bf16.gmra.mrb[0].mxu0 %v923
    %v959 = vpop.f32.mrb[0].mxu0
    %v960 = vadd.f32 %v907, %v959
    %v961 = vpop.f32.mrb[0].mxu0
    %v962 = vpop.f32.mrb[0].mxu0
    %v963 = vpop.f32.mrb[0].mxu0
    %964 = vdwg.mxu0
    %965 = vst [vmem:[#allocation5] sm:$0xff] %v960
    // Predicated region
    $region42: #{tpu_custom_call.1} parent=1 // pred_check
      _
    $region43: #{tpu_custom_call.1} parent=1 // pred_check_branch
      %967 = sbr.rel (0) target = $region45
    $region44: #{tpu_custom_call.1} parent=1 // pred_region
      %s969 = ssub.s32 128, 128
      %970 = vsyncadd [#allocation4], %s969
      %s972 = sshll.u32 [#allocation5], 4
      %s973 = int_to_ptr.vmem [resolvable:$true] %s972
      %975 = dma.vmem_to_hbm [thread:$0]  %s973, 128, %s9, [#allocation4]
    $region45: #{tpu_custom_call.1} parent=1 // pred_fallthru
      _
    // Predicated region
    $region46: #{tpu_custom_call.1} parent=1 // pred_check
      _
    $region47: #{tpu_custom_call.1} parent=1 // pred_check_branch
      %977 = sbr.rel (0) target = $region49
    $region48: #{tpu_custom_call.1} parent=1 // pred_region
      %978 = dma.done [#allocation4], 128
    $region49: #{tpu_custom_call.1} parent=1 // pred_fallthru
      _
    %979 = vsyncpa [#allocation3], 1
    %980 = vsyncpa [#allocation4], 1

</llo_original>
